<compile_context>
chip_gen: v7x
topology: tpu7x:2x2x1
jax: 0.10.0
libtpu: 0.0.40
codegen_flags: <defaults>
</compile_context>

<pallas_src>
import math
import jax
import jax.numpy as jnp
from jax.experimental import pallas as pl
from jax.experimental.pallas import tpu as pltpu


def rnn_fused_kernel(x_ref, wih_ref, whh_ref, b_ref, wfc_ref, bfc_ref,
                     out_ref, xproj_ref, hs_ref):
    """Fused tanh-RNN recurrence + fc + sigmoid, single invocation, all VMEM resident.

    x_ref    : (T*B, I)  time-major flattened inputs
    wih_ref  : (I, H)    W_ih^T
    whh_ref  : (H, H)    W_hh^T
    b_ref    : (1, H)    b_ih + b_hh (pre-added)
    wfc_ref  : (1, H)    fc weight row (n_outputs == 1)
    bfc_ref  : (1, 1)    fc bias
    out_ref  : (B, T)    sigmoid(fc(h_t)) — lane-dense output (T is the last axis)
    xproj_ref: (T*B, H)  scratch: precomputed input projection
    hs_ref   : (T, B, H) scratch: hidden-state trajectory (never written to HBM)
    """
    T, B, H = hs_ref.shape

    # 1) Input projection hoisted off the serial path: ONE throughput-friendly MXU matmul
    #    over all time steps.  Bias folded in here once (nothing to add per step).
    xproj_ref[...] = (
        jnp.dot(x_ref[...], wih_ref[...], preferred_element_type=jnp.float32)
        + b_ref[...])

    # 2) Loop-invariant weight load hoisted out of the (unrolled) step body.
    w_hh = whh_ref[...]

    # 3) The only truly serial part: h_t = tanh(xproj_t + h_{t-1} @ W_hh^T).
    def step(t, h):
        row = pl.multiple_of(t * B, B)
        pre = xproj_ref[pl.ds(row, B), :] + jnp.dot(
            h, w_hh, preferred_element_type=jnp.float32)
        h_new = jnp.tanh(pre)
        hs_ref[t] = h_new
        return h_new

    h0 = jnp.zeros((B, H), jnp.float32)   # hidden_state=None -> init_hidden() zeros
    # Partial unroll: full unroll for short T, cap at 8 to keep code size / vreg pressure sane.
    jax.lax.fori_loop(0, T, step, h0, unroll=min(T, 8))

    # 4) Fused dropout(p=0)=identity + fc + sigmoid epilogue.  n_outputs == 1, so the head
    #    is a VPU multiply + lane reduce (no degenerate N=1 MXU matmul); output is written
    #    lane-dense as (B, T).
    hs = hs_ref[...]                                   # (T, B, H)
    logits_tb = jnp.sum(hs * wfc_ref[...], axis=-1)    # (T, B)
    out_ref[...] = jax.nn.sigmoid(jnp.transpose(logits_tb) + bfc_ref[...])


@jax.jit
def vanilla_rnn_forward(x, params):
    """x: (batch, seq, n_inputs) float32. Returns (batch*seq, n_outputs) like the module."""
    w_ih, w_hh, b_ih, b_hh, w_fc, b_fc = params
    B, T, I = x.shape
    H = w_hh.shape[0]
    O = w_fc.shape[0]
    if O != 1:
        # TODO(synk): softmax head (n_outputs > 1) not implemented; module default is 1 -> Sigmoid.
        raise NotImplementedError("only the n_outputs == 1 (Sigmoid) head is implemented")

    # Tiny input-layout prep in the wrapper (outside the kernel, before the single call):
    # time-major flatten so the in-kernel input projection is one 2-D matmul.
    x_flat = jnp.transpose(x.astype(jnp.float32), (1, 0, 2)).reshape(T * B, I)  # (T*B, I)
    w_ih_t = w_ih.T.astype(jnp.float32)                                         # (I, H)
    w_hh_t = w_hh.T.astype(jnp.float32)                                         # (H, H)
    b_sum = (b_ih + b_hh).reshape(1, H).astype(jnp.float32)                     # (1, H)
    w_fc_row = w_fc.reshape(1, H).astype(jnp.float32)                           # (1, H)
    b_fc_11 = b_fc.reshape(1, 1).astype(jnp.float32)                            # (1, 1)

    # Everything (inputs + both scratches) is VMEM resident for this single invocation.
    # TODO(synk): for production sequence lengths where 4*(T*B*(I+2H) + H*H) approaches
    # v7x's 64 MiB VMEM, switch to a T-chunked grid carrying h in a VMEM scratch across an
    # "arbitrary" axis; also consider batch-sharding across v7x's 2 TensorCores and bf16
    # MXU operands on v6e/v7x when B/H scale.
    vmem = pl.BlockSpec(memory_space=pltpu.MemorySpace.VMEM)

    out_bt = pl.pallas_call(
        rnn_fused_kernel,
        out_shape=jax.ShapeDtypeStruct((B, T), jnp.float32),
        in_specs=[vmem] * 6,
        out_specs=vmem,
        scratch_shapes=[pltpu.VMEM((T * B, H), jnp.float32),   # xproj
                        pltpu.VMEM((T, B, H), jnp.float32)],   # hidden trajectory
        compiler_params=pltpu.CompilerParams(vmem_limit_bytes=32 * 1024 * 1024),
    )(x_flat, w_ih_t, w_hh_t, b_sum, w_fc_row, b_fc_11)

    # Matches rnn_output.contiguous().view(-1, n_hidden) -> fc -> sigmoid ordering (b-major).
    return out_bt.reshape(B * T, O)


def reference_forward(x, params):
    """Pure-JAX reference of the same forward pass (for correctness check)."""
    w_ih, w_hh, b_ih, b_hh, w_fc, b_fc = params
    B, T, I = x.shape
    H = w_hh.shape[0]

    def step(h, x_t):
        h_new = jnp.tanh(x_t @ w_ih.T + b_ih + h @ w_hh.T + b_hh)
        return h_new, h_new

    h0 = jnp.zeros((B, H), jnp.float32)
    _, hs = jax.lax.scan(step, h0, jnp.transpose(x, (1, 0, 2)))   # (T, B, H)
    rnn_out = jnp.transpose(hs, (1, 0, 2))                        # (B, T, H)
    flat = rnn_out.reshape(-1, H)
    logits = flat @ w_fc.T + b_fc
    return jax.nn.sigmoid(logits)


def init_params(key, n_inputs, n_hidden, n_outputs):
    """Deterministic init mirroring PyTorch's U(-1/sqrt(H), 1/sqrt(H)) scheme."""
    k = 1.0 / math.sqrt(n_hidden)
    keys = jax.random.split(key, 6)
    w_ih = jax.random.uniform(keys[0], (n_hidden, n_inputs), jnp.float32, -k, k)
    w_hh = jax.random.uniform(keys[1], (n_hidden, n_hidden), jnp.float32, -k, k)
    b_ih = jax.random.uniform(keys[2], (n_hidden,), jnp.float32, -k, k)
    b_hh = jax.random.uniform(keys[3], (n_hidden,), jnp.float32, -k, k)
    w_fc = jax.random.uniform(keys[4], (n_outputs, n_hidden), jnp.float32, -k, k)
    b_fc = jax.random.uniform(keys[5], (n_outputs,), jnp.float32, -k, k)
    return (w_ih, w_hh, b_ih, b_hh, w_fc, b_fc)


if __name__ == "__main__":
    # Small, module-consistent shapes: batch=2, seq=8, n_inputs=4, n_hidden=32, n_outputs=1
    B, T, I, H, O = 2, 8, 4, 32, 1

    key = jax.random.PRNGKey(0)
    kx, kp = jax.random.split(key)
    x = jax.random.normal(kx, (B, T, I), jnp.float32)
    params = init_params(kp, I, H, O)

    out = vanilla_rnn_forward(x, params)
    out = jax.block_until_ready(out)

    ref = reference_forward(x, params)
    assert out.shape == (B * T, O), out.shape
    assert jnp.allclose(out, ref, atol=1e-5, rtol=1e-5), "mismatch vs pure-JAX reference"

    # TODO(synk): pack_padded_sequence / variable seq_lengths path and the embedding-bag
    # (embed_features) path are not implemented (forward exercised with defaults: None/0).
    print("KERNEL_OK")
</pallas_src>

<mosaic_0001>
module attributes {stable_mosaic.version = 11 : i64} {
  func.func @rnn_fused_kernel(%arg0: memref<16x4xf32, #tpu.memory_space<vmem>>, %arg1: memref<4x32xf32, #tpu.memory_space<vmem>>, %arg2: memref<32x32xf32, #tpu.memory_space<vmem>>, %arg3: memref<1x32xf32, #tpu.memory_space<vmem>>, %arg4: memref<1x32xf32, #tpu.memory_space<vmem>>, %arg5: memref<1x1xf32, #tpu.memory_space<vmem>>, %arg6: memref<2x8xf32, #tpu.memory_space<vmem>>, %arg7: memref<16x32xf32, #tpu.memory_space<vmem>>, %arg8: memref<8x2x32xf32, #tpu.memory_space<vmem>>) attributes {dimension_semantics = [], scalar_prefetch = 0 : i64, scratch_operands = 2 : i64, tpu.core_type = #tpu.core_type<tc>} {
    %c0 = arith.constant 0 : index
    %c0_0 = arith.constant 0 : index
    %0 = vector.load %arg0[%c0, %c0_0] : memref<16x4xf32, #tpu.memory_space<vmem>>, vector<16x4xf32>
    %c0_1 = arith.constant 0 : index
    %c0_2 = arith.constant 0 : index
    %1 = vector.load %arg1[%c0_1, %c0_2] : memref<4x32xf32, #tpu.memory_space<vmem>>, vector<4x32xf32>
    %cst = arith.constant dense<0.000000e+00> : vector<16x32xf32>
    %2 = tpu.matmul %0, %1, %cst {dimension_numbers = #tpu.dot_dimension_numbers<[1], [0], [0], [1], [0, 0, 1, 1], [], []>} : vector<16x4xf32>, vector<4x32xf32>, vector<16x32xf32> -> vector<16x32xf32>
    %c0_3 = arith.constant 0 : index
    %c0_4 = arith.constant 0 : index
    %3 = vector.load %arg3[%c0_3, %c0_4] : memref<1x32xf32, #tpu.memory_space<vmem>>, vector<1x32xf32>
    %4 = vector.broadcast %3 : vector<1x32xf32> to vector<16x32xf32>
    %5 = arith.addf %2, %4 : vector<16x32xf32>
    %c0_5 = arith.constant 0 : index
    %c0_6 = arith.constant 0 : index
    %6 = vector.load %arg7[%c0_5, %c0_6] : memref<16x32xf32, #tpu.memory_space<vmem>>, vector<16x32xf32>
    tpu.vector_store %arg7[%c0_5, %c0_6], %5 {strides = array<i32>} : memref<16x32xf32, #tpu.memory_space<vmem>>, vector<16x32xf32>,
    %c0_7 = arith.constant 0 : index
    %c0_8 = arith.constant 0 : index
    %7 = vector.load %arg2[%c0_7, %c0_8] : memref<32x32xf32, #tpu.memory_space<vmem>>, vector<32x32xf32>
    %cst_9 = arith.constant 0.000000e+00 : f32
    %8 = vector.broadcast %cst_9 : f32 to vector<2x32xf32>
    %c0_i32 = arith.constant 0 : i32
    %c2_i32 = arith.constant 2 : i32
    %9 = arith.muli %c0_i32, %c2_i32 : i32
    %10 = tpu.assume_multiple %9, 2 : i32
    %11 = arith.index_cast %10 : i32 to index
    %c0_10 = arith.constant 0 : index
    %12 = vector.load %arg7[%11, %c0_10] : memref<16x32xf32, #tpu.memory_space<vmem>>, vector<2x32xf32>
    %cst_11 = arith.constant dense<0.000000e+00> : vector<2x32xf32>
    %13 = tpu.matmul %8, %7, %cst_11 {dimension_numbers = #tpu.dot_dimension_numbers<[1], [0], [0], [1], [0, 0, 1, 1], [], []>} : vector<2x32xf32>, vector<32x32xf32>, vector<2x32xf32> -> vector<2x32xf32>
    %14 = arith.addf %12, %13 : vector<2x32xf32>
    %15 = math.tanh %14 : vector<2x32xf32>
    %16 = arith.index_cast %c0_i32 : i32 to index
    %c0_12 = arith.constant 0 : index
    %c0_13 = arith.constant 0 : index
    %17 = vector.load %arg8[%16, %c0_12, %c0_13] : memref<8x2x32xf32, #tpu.memory_space<vmem>>, vector<1x2x32xf32>
    %18 = vector.shape_cast %17 : vector<1x2x32xf32> to vector<2x32xf32>
    %19 = vector.shape_cast %15 : vector<2x32xf32> to vector<1x2x32xf32>
    tpu.vector_store %arg8[%16, %c0_12, %c0_13], %19 {strides = array<i32>} : memref<8x2x32xf32, #tpu.memory_space<vmem>>, vector<1x2x32xf32>,
    %c1_i32 = arith.constant 1 : i32
    %c2_i32_14 = arith.constant 2 : i32
    %20 = arith.muli %c1_i32, %c2_i32_14 : i32
    %21 = tpu.assume_multiple %20, 2 : i32
    %22 = arith.index_cast %21 : i32 to index
    %c0_15 = arith.constant 0 : index
    %23 = vector.load %arg7[%22, %c0_15] : memref<16x32xf32, #tpu.memory_space<vmem>>, vector<2x32xf32>
    %cst_16 = arith.constant dense<0.000000e+00> : vector<2x32xf32>
    %24 = tpu.matmul %15, %7, %cst_16 {dimension_numbers = #tpu.dot_dimension_numbers<[1], [0], [0], [1], [0, 0, 1, 1], [], []>} : vector<2x32xf32>, vector<32x32xf32>, vector<2x32xf32> -> vector<2x32xf32>
    %25 = arith.addf %23, %24 : vector<2x32xf32>
    %26 = math.tanh %25 : vector<2x32xf32>
    %27 = arith.index_cast %c1_i32 : i32 to index
    %c0_17 = arith.constant 0 : index
    %c0_18 = arith.constant 0 : index
    %28 = vector.load %arg8[%27, %c0_17, %c0_18] : memref<8x2x32xf32, #tpu.memory_space<vmem>>, vector<1x2x32xf32>
    %29 = vector.shape_cast %28 : vector<1x2x32xf32> to vector<2x32xf32>
    %30 = vector.shape_cast %26 : vector<2x32xf32> to vector<1x2x32xf32>
    tpu.vector_store %arg8[%27, %c0_17, %c0_18], %30 {strides = array<i32>} : memref<8x2x32xf32, #tpu.memory_space<vmem>>, vector<1x2x32xf32>,
    %c2_i32_19 = arith.constant 2 : i32
    %c2_i32_20 = arith.constant 2 : i32
    %31 = arith.muli %c2_i32_19, %c2_i32_20 : i32
    %32 = tpu.assume_multiple %31, 2 : i32
    %33 = arith.index_cast %32 : i32 to index
    %c0_21 = arith.constant 0 : index
    %34 = vector.load %arg7[%33, %c0_21] : memref<16x32xf32, #tpu.memory_space<vmem>>, vector<2x32xf32>
    %cst_22 = arith.constant dense<0.000000e+00> : vector<2x32xf32>
    %35 = tpu.matmul %26, %7, %cst_22 {dimension_numbers = #tpu.dot_dimension_numbers<[1], [0], [0], [1], [0, 0, 1, 1], [], []>} : vector<2x32xf32>, vector<32x32xf32>, vector<2x32xf32> -> vector<2x32xf32>
    %36 = arith.addf %34, %35 : vector<2x32xf32>
    %37 = math.tanh %36 : vector<2x32xf32>
    %38 = arith.index_cast %c2_i32_19 : i32 to index
    %c0_23 = arith.constant 0 : index
    %c0_24 = arith.constant 0 : index
    %39 = vector.load %arg8[%38, %c0_23, %c0_24] : memref<8x2x32xf32, #tpu.memory_space<vmem>>, vector<1x2x32xf32>
    %40 = vector.shape_cast %39 : vector<1x2x32xf32> to vector<2x32xf32>
    %41 = vector.shape_cast %37 : vector<2x32xf32> to vector<1x2x32xf32>
    tpu.vector_store %arg8[%38, %c0_23, %c0_24], %41 {strides = array<i32>} : memref<8x2x32xf32, #tpu.memory_space<vmem>>, vector<1x2x32xf32>,
    %c3_i32 = arith.constant 3 : i32
    %c2_i32_25 = arith.constant 2 : i32
    %42 = arith.muli %c3_i32, %c2_i32_25 : i32
    %43 = tpu.assume_multiple %42, 2 : i32
    %44 = arith.index_cast %43 : i32 to index
    %c0_26 = arith.constant 0 : index
    %45 = vector.load %arg7[%44, %c0_26] : memref<16x32xf32, #tpu.memory_space<vmem>>, vector<2x32xf32>
    %cst_27 = arith.constant dense<0.000000e+00> : vector<2x32xf32>
    %46 = tpu.matmul %37, %7, %cst_27 {dimension_numbers = #tpu.dot_dimension_numbers<[1], [0], [0], [1], [0, 0, 1, 1], [], []>} : vector<2x32xf32>, vector<32x32xf32>, vector<2x32xf32> -> vector<2x32xf32>
    %47 = arith.addf %45, %46 : vector<2x32xf32>
    %48 = math.tanh %47 : vector<2x32xf32>
    %49 = arith.index_cast %c3_i32 : i32 to index
    %c0_28 = arith.constant 0 : index
    %c0_29 = arith.constant 0 : index
    %50 = vector.load %arg8[%49, %c0_28, %c0_29] : memref<8x2x32xf32, #tpu.memory_space<vmem>>, vector<1x2x32xf32>
    %51 = vector.shape_cast %50 : vector<1x2x32xf32> to vector<2x32xf32>
    %52 = vector.shape_cast %48 : vector<2x32xf32> to vector<1x2x32xf32>
    tpu.vector_store %arg8[%49, %c0_28, %c0_29], %52 {strides = array<i32>} : memref<8x2x32xf32, #tpu.memory_space<vmem>>, vector<1x2x32xf32>,
    %c4_i32 = arith.constant 4 : i32
    %c2_i32_30 = arith.constant 2 : i32
    %53 = arith.muli %c4_i32, %c2_i32_30 : i32
    %54 = tpu.assume_multiple %53, 2 : i32
    %55 = arith.index_cast %54 : i32 to index
    %c0_31 = arith.constant 0 : index
    %56 = vector.load %arg7[%55, %c0_31] : memref<16x32xf32, #tpu.memory_space<vmem>>, vector<2x32xf32>
    %cst_32 = arith.constant dense<0.000000e+00> : vector<2x32xf32>
    %57 = tpu.matmul %48, %7, %cst_32 {dimension_numbers = #tpu.dot_dimension_numbers<[1], [0], [0], [1], [0, 0, 1, 1], [], []>} : vector<2x32xf32>, vector<32x32xf32>, vector<2x32xf32> -> vector<2x32xf32>
    %58 = arith.addf %56, %57 : vector<2x32xf32>
    %59 = math.tanh %58 : vector<2x32xf32>
    %60 = arith.index_cast %c4_i32 : i32 to index
    %c0_33 = arith.constant 0 : index
    %c0_34 = arith.constant 0 : index
    %61 = vector.load %arg8[%60, %c0_33, %c0_34] : memref<8x2x32xf32, #tpu.memory_space<vmem>>, vector<1x2x32xf32>
    %62 = vector.shape_cast %61 : vector<1x2x32xf32> to vector<2x32xf32>
    %63 = vector.shape_cast %59 : vector<2x32xf32> to vector<1x2x32xf32>
    tpu.vector_store %arg8[%60, %c0_33, %c0_34], %63 {strides = array<i32>} : memref<8x2x32xf32, #tpu.memory_space<vmem>>, vector<1x2x32xf32>,
    %c5_i32 = arith.constant 5 : i32
    %c2_i32_35 = arith.constant 2 : i32
    %64 = arith.muli %c5_i32, %c2_i32_35 : i32
    %65 = tpu.assume_multiple %64, 2 : i32
    %66 = arith.index_cast %65 : i32 to index
    %c0_36 = arith.constant 0 : index
    %67 = vector.load %arg7[%66, %c0_36] : memref<16x32xf32, #tpu.memory_space<vmem>>, vector<2x32xf32>
    %cst_37 = arith.constant dense<0.000000e+00> : vector<2x32xf32>
    %68 = tpu.matmul %59, %7, %cst_37 {dimension_numbers = #tpu.dot_dimension_numbers<[1], [0], [0], [1], [0, 0, 1, 1], [], []>} : vector<2x32xf32>, vector<32x32xf32>, vector<2x32xf32> -> vector<2x32xf32>
    %69 = arith.addf %67, %68 : vector<2x32xf32>
    %70 = math.tanh %69 : vector<2x32xf32>
    %71 = arith.index_cast %c5_i32 : i32 to index
    %c0_38 = arith.constant 0 : index
    %c0_39 = arith.constant 0 : index
    %72 = vector.load %arg8[%71, %c0_38, %c0_39] : memref<8x2x32xf32, #tpu.memory_space<vmem>>, vector<1x2x32xf32>
    %73 = vector.shape_cast %72 : vector<1x2x32xf32> to vector<2x32xf32>
    %74 = vector.shape_cast %70 : vector<2x32xf32> to vector<1x2x32xf32>
    tpu.vector_store %arg8[%71, %c0_38, %c0_39], %74 {strides = array<i32>} : memref<8x2x32xf32, #tpu.memory_space<vmem>>, vector<1x2x32xf32>,
    %c6_i32 = arith.constant 6 : i32
    %c2_i32_40 = arith.constant 2 : i32
    %75 = arith.muli %c6_i32, %c2_i32_40 : i32
    %76 = tpu.assume_multiple %75, 2 : i32
    %77 = arith.index_cast %76 : i32 to index
    %c0_41 = arith.constant 0 : index
    %78 = vector.load %arg7[%77, %c0_41] : memref<16x32xf32, #tpu.memory_space<vmem>>, vector<2x32xf32>
    %cst_42 = arith.constant dense<0.000000e+00> : vector<2x32xf32>
    %79 = tpu.matmul %70, %7, %cst_42 {dimension_numbers = #tpu.dot_dimension_numbers<[1], [0], [0], [1], [0, 0, 1, 1], [], []>} : vector<2x32xf32>, vector<32x32xf32>, vector<2x32xf32> -> vector<2x32xf32>
    %80 = arith.addf %78, %79 : vector<2x32xf32>
    %81 = math.tanh %80 : vector<2x32xf32>
    %82 = arith.index_cast %c6_i32 : i32 to index
    %c0_43 = arith.constant 0 : index
    %c0_44 = arith.constant 0 : index
    %83 = vector.load %arg8[%82, %c0_43, %c0_44] : memref<8x2x32xf32, #tpu.memory_space<vmem>>, vector<1x2x32xf32>
    %84 = vector.shape_cast %83 : vector<1x2x32xf32> to vector<2x32xf32>
    %85 = vector.shape_cast %81 : vector<2x32xf32> to vector<1x2x32xf32>
    tpu.vector_store %arg8[%82, %c0_43, %c0_44], %85 {strides = array<i32>} : memref<8x2x32xf32, #tpu.memory_space<vmem>>, vector<1x2x32xf32>,
    %c7_i32 = arith.constant 7 : i32
    %c2_i32_45 = arith.constant 2 : i32
    %86 = arith.muli %c7_i32, %c2_i32_45 : i32
    %87 = tpu.assume_multiple %86, 2 : i32
    %88 = arith.index_cast %87 : i32 to index
    %c0_46 = arith.constant 0 : index
    %89 = vector.load %arg7[%88, %c0_46] : memref<16x32xf32, #tpu.memory_space<vmem>>, vector<2x32xf32>
    %cst_47 = arith.constant dense<0.000000e+00> : vector<2x32xf32>
    %90 = tpu.matmul %81, %7, %cst_47 {dimension_numbers = #tpu.dot_dimension_numbers<[1], [0], [0], [1], [0, 0, 1, 1], [], []>} : vector<2x32xf32>, vector<32x32xf32>, vector<2x32xf32> -> vector<2x32xf32>
    %91 = arith.addf %89, %90 : vector<2x32xf32>
    %92 = math.tanh %91 : vector<2x32xf32>
    %93 = arith.index_cast %c7_i32 : i32 to index
    %c0_48 = arith.constant 0 : index
    %c0_49 = arith.constant 0 : index
    %94 = vector.load %arg8[%93, %c0_48, %c0_49] : memref<8x2x32xf32, #tpu.memory_space<vmem>>, vector<1x2x32xf32>
    %95 = vector.shape_cast %94 : vector<1x2x32xf32> to vector<2x32xf32>
    %96 = vector.shape_cast %92 : vector<2x32xf32> to vector<1x2x32xf32>
    tpu.vector_store %arg8[%93, %c0_48, %c0_49], %96 {strides = array<i32>} : memref<8x2x32xf32, #tpu.memory_space<vmem>>, vector<1x2x32xf32>,
    %c8_i32 = arith.constant 8 : i32
    %c0_50 = arith.constant 0 : index
    %c0_51 = arith.constant 0 : index
    %c0_52 = arith.constant 0 : index
    %97 = vector.load %arg8[%c0_50, %c0_51, %c0_52] : memref<8x2x32xf32, #tpu.memory_space<vmem>>, vector<8x2x32xf32>
    %c0_53 = arith.constant 0 : index
    %c0_54 = arith.constant 0 : index
    %98 = vector.load %arg4[%c0_53, %c0_54] : memref<1x32xf32, #tpu.memory_space<vmem>>, vector<1x32xf32>
    %99 = vector.shape_cast %98 : vector<1x32xf32> to vector<1x1x32xf32>
    %100 = vector.broadcast %99 : vector<1x1x32xf32> to vector<8x2x32xf32>
    %101 = arith.mulf %97, %100 : vector<8x2x32xf32>
    %cst_55 = arith.constant dense<0.000000e+00> : vector<8x2xf32>
    %102 = vector.multi_reduction <add>, %101, %cst_55 [2] : vector<8x2x32xf32> to vector<8x2xf32>
    %103 = tpu.transpose %102, [1, 0] : vector<8x2xf32> -> vector<2x8xf32>
    %c0_56 = arith.constant 0 : index
    %c0_57 = arith.constant 0 : index
    %104 = vector.load %arg5[%c0_56, %c0_57] : memref<1x1xf32, #tpu.memory_space<vmem>>, vector<1x1xf32>
    %105 = vector.broadcast %104 : vector<1x1xf32> to vector<2x8xf32>
    %106 = arith.addf %103, %105 : vector<2x8xf32>
    %107 = arith.negf %106 : vector<2x8xf32>
    %108 = math.exp %107 : vector<2x8xf32>
    %cst_58 = arith.constant 1.000000e+00 : f32
    %109 = vector.broadcast %cst_58 : f32 to vector<2x8xf32>
    %110 = arith.addf %109, %108 : vector<2x8xf32>
    %111 = arith.divf %109, %110 : vector<2x8xf32>
    %c0_59 = arith.constant 0 : index
    %c0_60 = arith.constant 0 : index
    %112 = vector.load %arg6[%c0_59, %c0_60] : memref<2x8xf32, #tpu.memory_space<vmem>>, vector<2x8xf32>
    tpu.vector_store %arg6[%c0_59, %c0_60], %111 {strides = array<i32>} : memref<2x8xf32, #tpu.memory_space<vmem>>, vector<2x8xf32>,
    return
  }
}

</mosaic_0001>

<llo_original>
// kernel: vanilla_rnn_forward.1
$region0: #{vanilla_rnn_forward.1}
  #allocation0 [shape = 'u32[]', space=smem, size = 0x4, offset = 0x4, fixed_abs, tag = 'smem constant byte address 0x4 - core index']
  #allocation1 [shape = 'u32[144,128]{1,0:T(1,128)}', space=vmem, size = 0x12000, scoped, tag = 'internal scratch']
  #allocation2 [shape = 'f32[16,32]{1,0:T(8,128)}', space=vmem, size = 0x2000, scoped, tag = 'scratch operand']
  #allocation3 [shape = 'f32[8,2,32]{2,1,0:T(2,128)}', space=vmem, size = 0x2000, scoped, tag = 'scratch operand']
  #allocation4 [shape = 'f32[1,1]{1,0:T(1,128)S(1)}', space=vmem, size = 0x200, scoped, tag = 'scoped memory for vanilla_rnn_forward.1']
  %s0 = inlined_call_operand.vmem [shape: f32[16,4], index: 0, kind: input, shape index: {}]
  %s1 = inlined_call_operand.vmem [shape: f32[4,32], index: 1, kind: input, shape index: {}]
  %s2 = inlined_call_operand.vmem [shape: f32[32,32], index: 2, kind: input, shape index: {}]
  %s3 = inlined_call_operand.vmem [shape: f32[1,32], index: 3, kind: input, shape index: {}]
  %s4 = inlined_call_operand.vmem [shape: f32[1,32], index: 4, kind: input, shape index: {}]
  %s5 = inlined_call_operand.<no memory space> [shape: f32[1,1], index: 5, kind: input, shape index: {}]
  %s6 = inlined_call_operand.vmem [shape: f32[2,8], index: 6, kind: output, shape index: {}]
  %s7 = sld [smem:[#allocation0]]
  $region34: #{vanilla_rnn_forward.1} parent=0
    _
  %s9 = ssub.s32 1, %s7
  %s10 = scalar_select 0, %s9, %s7
  %v11 = vstv %s5
  %12 = vst [vmem:[#allocation4] sm:$0x1] %v11
  // Predicated region
  $region2: #{vanilla_rnn_forward.1} parent=0 // pred_check
    _
  $region3: #{vanilla_rnn_forward.1} parent=0 // pred_check_branch
    %14 = sbr.rel (0) target = $region5
  $region4: #{vanilla_rnn_forward.1} parent=0 // pred_region
    _
  $region5: #{vanilla_rnn_forward.1} parent=0 // pred_fallthru
    _
  // Predicated region
  $region6: #{vanilla_rnn_forward.1} parent=0 // pred_check
    _
  $region7: #{vanilla_rnn_forward.1} parent=0 // pred_check_branch
    %16 = sbr.rel (0) target = $region9
  $region8: #{vanilla_rnn_forward.1} parent=0 // pred_region
    _
  $region9: #{vanilla_rnn_forward.1} parent=0 // pred_fallthru
    _
  // Predicated region
  $region10: #{vanilla_rnn_forward.1} parent=0 // pred_check
    _
  $region11: #{vanilla_rnn_forward.1} parent=0 // pred_check_branch
    %18 = sbr.rel (0) target = $region13
  $region12: #{vanilla_rnn_forward.1} parent=0 // pred_region
    _
  $region13: #{vanilla_rnn_forward.1} parent=0 // pred_fallthru
    _
  // Predicated region
  $region14: #{vanilla_rnn_forward.1} parent=0 // pred_check
    _
  $region15: #{vanilla_rnn_forward.1} parent=0 // pred_check_branch
    %20 = sbr.rel (0) target = $region17
  $region16: #{vanilla_rnn_forward.1} parent=0 // pred_region
    _
  $region17: #{vanilla_rnn_forward.1} parent=0 // pred_fallthru
    _
  // Predicated region
  $region18: #{vanilla_rnn_forward.1} parent=0 // pred_check
    _
  $region19: #{vanilla_rnn_forward.1} parent=0 // pred_check_branch
    %22 = sbr.rel (0) target = $region21
  $region20: #{vanilla_rnn_forward.1} parent=0 // pred_region
    _
  $region21: #{vanilla_rnn_forward.1} parent=0 // pred_fallthru
    _
  // Predicated region
  $region22: #{vanilla_rnn_forward.1} parent=0 // pred_check
    _
  $region23: #{vanilla_rnn_forward.1} parent=0 // pred_check_branch
    %24 = sbr.rel (0) target = $region25
  $region24: #{vanilla_rnn_forward.1} parent=0 // pred_region
    _
  $region25: #{vanilla_rnn_forward.1} parent=0 // pred_fallthru
    _
  %v25 = vld [vmem:[%s0] sm:$0xff]
  %v26 = vld [vmem:[%s0 + $0x8] sm:$0xff]
  %v27 = vld [vmem:[%s1] sm:$0xf]
  %v28 = vld [vmem:[%s3] sm:$0x1]
  %v30 = vlaneseq
  %v31 = vshrl.u32 %v30, 7
  %v32 = vsub.s32 0, %v31
  %v33 = vrot.slane %v28, %v32
  %vm35 = vcmask 31744
  %v37 = vsel %vm35, %v25, 0
  %v40 = vsel %vm35, %v26, 0
  %vm42 = vcmask 1043456
  %v44 = vsel %vm42, %v27, 0
  %46 = vmatprep.subr.mxu0 0.0
  %47 = vmatpush1.msra.mxu0 %v44
  %48 = vmatprep.subr.mxu0 0.0
  %49 = vmatpush1.msra.mxu0 0.0
  %50 = vmatprep.subr.mxu0 0.0
  %51 = vmatpush1.msra.mxu0 0.0
  %52 = vmatprep.subr.mxu0 0.0
  %53 = vmatpush1.msra.mxu0 0.0
  %54 = vmatprep.subr.mxu0 0.0
  %55 = vmatpush1.msra.mxu0 0.0
  %56 = vmatprep.subr.mxu0 0.0
  %57 = vmatpush1.msra.mxu0 0.0
  %58 = vmatprep.subr.mxu0 0.0
  %59 = vmatpush1.msra.mxu0 0.0
  %60 = vmatprep.subr.mxu0 0.0
  %61 = vmatpush1.msra.mxu0 0.0
  %62 = vmatprep.subr.mxu0 0.0
  %63 = vmatpush1.msra.mxu0 0.0
  %64 = vmatprep.subr.mxu0 0.0
  %65 = vmatpush1.msra.mxu0 0.0
  %66 = vmatprep.subr.mxu0 0.0
  %67 = vmatpush1.msra.mxu0 0.0
  %68 = vmatprep.subr.mxu0 0.0
  %69 = vmatpush1.msra.mxu0 0.0
  %70 = vmatprep.subr.mxu0 0.0
  %71 = vmatpush1.msra.mxu0 0.0
  %72 = vmatprep.subr.mxu0 0.0
  %73 = vmatpush1.msra.mxu0 0.0
  %74 = vmatprep.subr.mxu0 0.0
  %75 = vmatpush1.msra.mxu0 0.0
  %76 = vmatprep.subr.mxu0 0.0
  %77 = vmatpush1.msra.mxu0 0.0
  %78 = vmatprep.subr.mxu0 0.0
  %79 = vmatpush1.msra.mxu0 0.0
  %80 = vmatprep.subr.mxu0 0.0
  %81 = vmatpush1.msra.mxu0 0.0
  %82 = vmatprep.subr.mxu0 0.0
  %83 = vmatpush1.msra.mxu0 0.0
  %84 = vmatprep.subr.mxu0 0.0
  %85 = vmatpush1.msra.mxu0 0.0
  %86 = vmatprep.subr.mxu0 0.0
  %87 = vmatpush1.msra.mxu0 0.0
  %88 = vmatprep.subr.mxu0 0.0
  %89 = vmatpush1.msra.mxu0 0.0
  %90 = vmatprep.subr.mxu0 0.0
  %91 = vmatpush1.msra.mxu0 0.0
  %92 = vmatprep.subr.mxu0 0.0
  %93 = vmatpush1.msra.mxu0 0.0
  %94 = vmatprep.subr.mxu0 0.0
  %95 = vmatpush1.msra.mxu0 0.0
  %96 = vmatprep.subr.mxu0 0.0
  %97 = vmatpush1.msra.mxu0 0.0
  %98 = vmatprep.subr.mxu0 0.0
  %99 = vmatpush1.msra.mxu0 0.0
  %100 = vmatprep.subr.mxu0 0.0
  %101 = vmatpush1.msra.mxu0 0.0
  %102 = vmatprep.subr.mxu0 0.0
  %103 = vmatpush1.msra.mxu0 0.0
  %104 = vmatprep.subr.mxu0 0.0
  %105 = vmatpush1.msra.mxu0 0.0
  %106 = vmatprep.subr.mxu0 0.0
  %107 = vmatpush1.msra.mxu0 0.0
  %108 = vmatprep.subr.mxu0 0.0
  %109 = vmatpush1.msra.mxu0 0.0
  %110 = vmatprep.mubr.f32.mxu0 0.0
  %111 = vmatmul.mubr.f32.gmra.mrb[0].mxu0 %v37
  %v112 = vpop.f32.mrb[0].mxu0
  %v113 = vadd.f32 %v33, %v112
  %v114 = vpop.f32.mrb[0].mxu0
  %115 = vmatprep.mubr.f32.mxu0 0.0
  %116 = vmatmul.mubr.f32.gmra.mrb[0].mxu0 %v40
  %v117 = vpop.f32.mrb[0].mxu0
  %v118 = vadd.f32 %v33, %v117
  %v119 = vpop.f32.mrb[0].mxu0
  %120 = vdwg.mxu0
  %vm121 = vcmask 261120
  %122 = vst.msk [vmem:[#allocation2] sm:$0xff] %vm121, %v113
  %123 = vst.msk [vmem:[#allocation2 + $0x8] sm:$0xff] %vm121, %v118
  %v124 = vld [vmem:[%s2] sm:$0xff]
  %v125 = vld [vmem:[%s2 + $0x8] sm:$0xff]
  %v126 = vld [vmem:[%s2 + $0x10] sm:$0xff]
  %v127 = vld [vmem:[%s2 + $0x18] sm:$0xff]
  %v128 = vld [vmem:[#allocation2] sm:$0x3]
  %v130 = vsel %vm121, 0.0, 0
  %132 = vmatprep.subr.mxu0 0.0
  %133 = vmatpush1.msra.mxu0 %v124
  %134 = vmatprep.subr.mxu0 0.0
  %135 = vmatpush1.msra.mxu0 %v125
  %136 = vmatprep.subr.mxu0 0.0
  %137 = vmatpush1.msra.mxu0 %v126
  %138 = vmatprep.subr.mxu0 0.0
  %139 = vmatpush1.msra.mxu0 %v127
  %140 = vmatprep.subr.mxu0 0.0
  %141 = vmatpush1.msra.mxu0 0.0
  %142 = vmatprep.subr.mxu0 0.0
  %143 = vmatpush1.msra.mxu0 0.0
  %144 = vmatprep.subr.mxu0 0.0
  %145 = vmatpush1.msra.mxu0 0.0
  %146 = vmatprep.subr.mxu0 0.0
  %147 = vmatpush1.msra.mxu0 0.0
  %148 = vmatprep.subr.mxu0 0.0
  %149 = vmatpush1.msra.mxu0 0.0
  %150 = vmatprep.subr.mxu0 0.0
  %151 = vmatpush1.msra.mxu0 0.0
  %152 = vmatprep.subr.mxu0 0.0
  %153 = vmatpush1.msra.mxu0 0.0
  %154 = vmatprep.subr.mxu0 0.0
  %155 = vmatpush1.msra.mxu0 0.0
  %156 = vmatprep.subr.mxu0 0.0
  %157 = vmatpush1.msra.mxu0 0.0
  %158 = vmatprep.subr.mxu0 0.0
  %159 = vmatpush1.msra.mxu0 0.0
  %160 = vmatprep.subr.mxu0 0.0
  %161 = vmatpush1.msra.mxu0 0.0
  %162 = vmatprep.subr.mxu0 0.0
  %163 = vmatpush1.msra.mxu0 0.0
  %164 = vmatprep.subr.mxu0 0.0
  %165 = vmatpush1.msra.mxu0 0.0
  %166 = vmatprep.subr.mxu0 0.0
  %167 = vmatpush1.msra.mxu0 0.0
  %168 = vmatprep.subr.mxu0 0.0
  %169 = vmatpush1.msra.mxu0 0.0
  %170 = vmatprep.subr.mxu0 0.0
  %171 = vmatpush1.msra.mxu0 0.0
  %172 = vmatprep.subr.mxu0 0.0
  %173 = vmatpush1.msra.mxu0 0.0
  %174 = vmatprep.subr.mxu0 0.0
  %175 = vmatpush1.msra.mxu0 0.0
  %176 = vmatprep.subr.mxu0 0.0
  %177 = vmatpush1.msra.mxu0 0.0
  %178 = vmatprep.subr.mxu0 0.0
  %179 = vmatpush1.msra.mxu0 0.0
  %180 = vmatprep.subr.mxu0 0.0
  %181 = vmatpush1.msra.mxu0 0.0
  %182 = vmatprep.subr.mxu0 0.0
  %183 = vmatpush1.msra.mxu0 0.0
  %184 = vmatprep.subr.mxu0 0.0
  %185 = vmatpush1.msra.mxu0 0.0
  %186 = vmatprep.subr.mxu0 0.0
  %187 = vmatpush1.msra.mxu0 0.0
  %188 = vmatprep.subr.mxu0 0.0
  %189 = vmatpush1.msra.mxu0 0.0
  %190 = vmatprep.subr.mxu0 0.0
  %191 = vmatpush1.msra.mxu0 0.0
  %192 = vmatprep.subr.mxu0 0.0
  %193 = vmatpush1.msra.mxu0 0.0
  %194 = vmatprep.subr.mxu0 0.0
  %195 = vmatpush1.msra.mxu0 0.0
  %196 = vmatprep.mubr.f32.mxu0 0.0
  %197 = vmatmul.mubr.f32.gmra.mrb[0].mxu0 %v130
  %v198 = vpop.f32.mrb[0].mxu0
  %v199 = vadd.f32 0.0, %v198
  %v200 = vpop.f32.mrb[0].mxu0
  %201 = vdwg.mxu0
  %v202 = vadd.f32 %v128, %v199
  %v203 = vtanh.pop %v202
  %vm204 = vcmask 254976
  %205 = vst.msk [vmem:[#allocation3] sm:$0x3] %vm204, %v203
  %s206 = scalar_lea.vmem [#allocation2], 2
  %v207 = vld [vmem:[%s206] sm:$0x3]
  %v209 = vsel %vm121, %v203, 0
  %211 = vmatprep.subr.mxu0 0.0
  %212 = vmatpush1.msra.mxu0 %v124
  %213 = vmatprep.subr.mxu0 0.0
  %214 = vmatpush1.msra.mxu0 %v125
  %215 = vmatprep.subr.mxu0 0.0
  %216 = vmatpush1.msra.mxu0 %v126
  %217 = vmatprep.subr.mxu0 0.0
  %218 = vmatpush1.msra.mxu0 %v127
  %219 = vmatprep.subr.mxu0 0.0
  %220 = vmatpush1.msra.mxu0 0.0
  %221 = vmatprep.subr.mxu0 0.0
  %222 = vmatpush1.msra.mxu0 0.0
  %223 = vmatprep.subr.mxu0 0.0
  %224 = vmatpush1.msra.mxu0 0.0
  %225 = vmatprep.subr.mxu0 0.0
  %226 = vmatpush1.msra.mxu0 0.0
  %227 = vmatprep.subr.mxu0 0.0
  %228 = vmatpush1.msra.mxu0 0.0
  %229 = vmatprep.subr.mxu0 0.0
  %230 = vmatpush1.msra.mxu0 0.0
  %231 = vmatprep.subr.mxu0 0.0
  %232 = vmatpush1.msra.mxu0 0.0
  %233 = vmatprep.subr.mxu0 0.0
  %234 = vmatpush1.msra.mxu0 0.0
  %235 = vmatprep.subr.mxu0 0.0
  %236 = vmatpush1.msra.mxu0 0.0
  %237 = vmatprep.subr.mxu0 0.0
  %238 = vmatpush1.msra.mxu0 0.0
  %239 = vmatprep.subr.mxu0 0.0
  %240 = vmatpush1.msra.mxu0 0.0
  %241 = vmatprep.subr.mxu0 0.0
  %242 = vmatpush1.msra.mxu0 0.0
  %243 = vmatprep.subr.mxu0 0.0
  %244 = vmatpush1.msra.mxu0 0.0
  %245 = vmatprep.subr.mxu0 0.0
  %246 = vmatpush1.msra.mxu0 0.0
  %247 = vmatprep.subr.mxu0 0.0
  %248 = vmatpush1.msra.mxu0 0.0
  %249 = vmatprep.subr.mxu0 0.0
  %250 = vmatpush1.msra.mxu0 0.0
  %251 = vmatprep.subr.mxu0 0.0
  %252 = vmatpush1.msra.mxu0 0.0
  %253 = vmatprep.subr.mxu0 0.0
  %254 = vmatpush1.msra.mxu0 0.0
  %255 = vmatprep.subr.mxu0 0.0
  %256 = vmatpush1.msra.mxu0 0.0
  %257 = vmatprep.subr.mxu0 0.0
  %258 = vmatpush1.msra.mxu0 0.0
  %259 = vmatprep.subr.mxu0 0.0
  %260 = vmatpush1.msra.mxu0 0.0
  %261 = vmatprep.subr.mxu0 0.0
  %262 = vmatpush1.msra.mxu0 0.0
  %263 = vmatprep.subr.mxu0 0.0
  %264 = vmatpush1.msra.mxu0 0.0
  %265 = vmatprep.subr.mxu0 0.0
  %266 = vmatpush1.msra.mxu0 0.0
  %267 = vmatprep.subr.mxu0 0.0
  %268 = vmatpush1.msra.mxu0 0.0
  %269 = vmatprep.subr.mxu0 0.0
  %270 = vmatpush1.msra.mxu0 0.0
  %271 = vmatprep.subr.mxu0 0.0
  %272 = vmatpush1.msra.mxu0 0.0
  %273 = vmatprep.subr.mxu0 0.0
  %274 = vmatpush1.msra.mxu0 0.0
  %275 = vmatprep.mubr.f32.mxu0 0.0
  %276 = vmatmul.mubr.f32.gmra.mrb[0].mxu0 %v209
  %v277 = vpop.f32.mrb[0].mxu0
  %v278 = vadd.f32 0.0, %v277
  %v279 = vpop.f32.mrb[0].mxu0
  %280 = vdwg.mxu0
  %v281 = vadd.f32 %v207, %v278
  %v282 = vtanh.pop %v281
  %s283 = scalar_lea.vmem [#allocation3], 2
  %284 = vst.msk [vmem:[%s283] sm:$0x3] %vm204, %v282
  %s285 = scalar_lea.vmem [#allocation2], 4
  %v286 = vld [vmem:[%s285] sm:$0x3]
  %v288 = vsel %vm121, %v282, 0
  %290 = vmatprep.subr.mxu0 0.0
  %291 = vmatpush1.msra.mxu0 %v124
  %292 = vmatprep.subr.mxu0 0.0
  %293 = vmatpush1.msra.mxu0 %v125
  %294 = vmatprep.subr.mxu0 0.0
  %295 = vmatpush1.msra.mxu0 %v126
  %296 = vmatprep.subr.mxu0 0.0
  %297 = vmatpush1.msra.mxu0 %v127
  %298 = vmatprep.subr.mxu0 0.0
  %299 = vmatpush1.msra.mxu0 0.0
  %300 = vmatprep.subr.mxu0 0.0
  %301 = vmatpush1.msra.mxu0 0.0
  %302 = vmatprep.subr.mxu0 0.0
  %303 = vmatpush1.msra.mxu0 0.0
  %304 = vmatprep.subr.mxu0 0.0
  %305 = vmatpush1.msra.mxu0 0.0
  %306 = vmatprep.subr.mxu0 0.0
  %307 = vmatpush1.msra.mxu0 0.0
  %308 = vmatprep.subr.mxu0 0.0
  %309 = vmatpush1.msra.mxu0 0.0
  %310 = vmatprep.subr.mxu0 0.0
  %311 = vmatpush1.msra.mxu0 0.0
  %312 = vmatprep.subr.mxu0 0.0
  %313 = vmatpush1.msra.mxu0 0.0
  %314 = vmatprep.subr.mxu0 0.0
  %315 = vmatpush1.msra.mxu0 0.0
  %316 = vmatprep.subr.mxu0 0.0
  %317 = vmatpush1.msra.mxu0 0.0
  %318 = vmatprep.subr.mxu0 0.0
  %319 = vmatpush1.msra.mxu0 0.0
  %320 = vmatprep.subr.mxu0 0.0
  %321 = vmatpush1.msra.mxu0 0.0
  %322 = vmatprep.subr.mxu0 0.0
  %323 = vmatpush1.msra.mxu0 0.0
  %324 = vmatprep.subr.mxu0 0.0
  %325 = vmatpush1.msra.mxu0 0.0
  %326 = vmatprep.subr.mxu0 0.0
  %327 = vmatpush1.msra.mxu0 0.0
  %328 = vmatprep.subr.mxu0 0.0
  %329 = vmatpush1.msra.mxu0 0.0
  %330 = vmatprep.subr.mxu0 0.0
  %331 = vmatpush1.msra.mxu0 0.0
  %332 = vmatprep.subr.mxu0 0.0
  %333 = vmatpush1.msra.mxu0 0.0
  %334 = vmatprep.subr.mxu0 0.0
  %335 = vmatpush1.msra.mxu0 0.0
  %336 = vmatprep.subr.mxu0 0.0
  %337 = vmatpush1.msra.mxu0 0.0
  %338 = vmatprep.subr.mxu0 0.0
  %339 = vmatpush1.msra.mxu0 0.0
  %340 = vmatprep.subr.mxu0 0.0
  %341 = vmatpush1.msra.mxu0 0.0
  %342 = vmatprep.subr.mxu0 0.0
  %343 = vmatpush1.msra.mxu0 0.0
  %344 = vmatprep.subr.mxu0 0.0
  %345 = vmatpush1.msra.mxu0 0.0
  %346 = vmatprep.subr.mxu0 0.0
  %347 = vmatpush1.msra.mxu0 0.0
  %348 = vmatprep.subr.mxu0 0.0
  %349 = vmatpush1.msra.mxu0 0.0
  %350 = vmatprep.subr.mxu0 0.0
  %351 = vmatpush1.msra.mxu0 0.0
  %352 = vmatprep.subr.mxu0 0.0
  %353 = vmatpush1.msra.mxu0 0.0
  %354 = vmatprep.mubr.f32.mxu0 0.0
  %355 = vmatmul.mubr.f32.gmra.mrb[0].mxu0 %v288
  %v356 = vpop.f32.mrb[0].mxu0
  %v357 = vadd.f32 0.0, %v356
  %v358 = vpop.f32.mrb[0].mxu0
  %359 = vdwg.mxu0
  %v360 = vadd.f32 %v286, %v357
  %v361 = vtanh.pop %v360
  %s362 = scalar_lea.vmem [#allocation3], 4
  %363 = vst.msk [vmem:[%s362] sm:$0x3] %vm204, %v361
  %s364 = scalar_lea.vmem [#allocation2], 6
  %v365 = vld [vmem:[%s364] sm:$0x3]
  %v367 = vsel %vm121, %v361, 0
  %369 = vmatprep.subr.mxu0 0.0
  %370 = vmatpush1.msra.mxu0 %v124
  %371 = vmatprep.subr.mxu0 0.0
  %372 = vmatpush1.msra.mxu0 %v125
  %373 = vmatprep.subr.mxu0 0.0
  %374 = vmatpush1.msra.mxu0 %v126
  %375 = vmatprep.subr.mxu0 0.0
  %376 = vmatpush1.msra.mxu0 %v127
  %377 = vmatprep.subr.mxu0 0.0
  %378 = vmatpush1.msra.mxu0 0.0
  %379 = vmatprep.subr.mxu0 0.0
  %380 = vmatpush1.msra.mxu0 0.0
  %381 = vmatprep.subr.mxu0 0.0
  %382 = vmatpush1.msra.mxu0 0.0
  %383 = vmatprep.subr.mxu0 0.0
  %384 = vmatpush1.msra.mxu0 0.0
  %385 = vmatprep.subr.mxu0 0.0
  %386 = vmatpush1.msra.mxu0 0.0
  %387 = vmatprep.subr.mxu0 0.0
  %388 = vmatpush1.msra.mxu0 0.0
  %389 = vmatprep.subr.mxu0 0.0
  %390 = vmatpush1.msra.mxu0 0.0
  %391 = vmatprep.subr.mxu0 0.0
  %392 = vmatpush1.msra.mxu0 0.0
  %393 = vmatprep.subr.mxu0 0.0
  %394 = vmatpush1.msra.mxu0 0.0
  %395 = vmatprep.subr.mxu0 0.0
  %396 = vmatpush1.msra.mxu0 0.0
  %397 = vmatprep.subr.mxu0 0.0
  %398 = vmatpush1.msra.mxu0 0.0
  %399 = vmatprep.subr.mxu0 0.0
  %400 = vmatpush1.msra.mxu0 0.0
  %401 = vmatprep.subr.mxu0 0.0
  %402 = vmatpush1.msra.mxu0 0.0
  %403 = vmatprep.subr.mxu0 0.0
  %404 = vmatpush1.msra.mxu0 0.0
  %405 = vmatprep.subr.mxu0 0.0
  %406 = vmatpush1.msra.mxu0 0.0
  %407 = vmatprep.subr.mxu0 0.0
  %408 = vmatpush1.msra.mxu0 0.0
  %409 = vmatprep.subr.mxu0 0.0
  %410 = vmatpush1.msra.mxu0 0.0
  %411 = vmatprep.subr.mxu0 0.0
  %412 = vmatpush1.msra.mxu0 0.0
  %413 = vmatprep.subr.mxu0 0.0
  %414 = vmatpush1.msra.mxu0 0.0
  %415 = vmatprep.subr.mxu0 0.0
  %416 = vmatpush1.msra.mxu0 0.0
  %417 = vmatprep.subr.mxu0 0.0
  %418 = vmatpush1.msra.mxu0 0.0
  %419 = vmatprep.subr.mxu0 0.0
  %420 = vmatpush1.msra.mxu0 0.0
  %421 = vmatprep.subr.mxu0 0.0
  %422 = vmatpush1.msra.mxu0 0.0
  %423 = vmatprep.subr.mxu0 0.0
  %424 = vmatpush1.msra.mxu0 0.0
  %425 = vmatprep.subr.mxu0 0.0
  %426 = vmatpush1.msra.mxu0 0.0
  %427 = vmatprep.subr.mxu0 0.0
  %428 = vmatpush1.msra.mxu0 0.0
  %429 = vmatprep.subr.mxu0 0.0
  %430 = vmatpush1.msra.mxu0 0.0
  %431 = vmatprep.subr.mxu0 0.0
  %432 = vmatpush1.msra.mxu0 0.0
  %433 = vmatprep.mubr.f32.mxu0 0.0
  %434 = vmatmul.mubr.f32.gmra.mrb[0].mxu0 %v367
  %v435 = vpop.f32.mrb[0].mxu0
  %v436 = vadd.f32 0.0, %v435
  %v437 = vpop.f32.mrb[0].mxu0
  %438 = vdwg.mxu0
  %v439 = vadd.f32 %v365, %v436
  %v440 = vtanh.pop %v439
  %s441 = scalar_lea.vmem [#allocation3], 6
  %442 = vst.msk [vmem:[%s441] sm:$0x3] %vm204, %v440
  %s443 = scalar_lea.vmem [#allocation2], 8
  %v444 = vld [vmem:[%s443] sm:$0x3]
  %v446 = vsel %vm121, %v440, 0
  %448 = vmatprep.subr.mxu0 0.0
  %449 = vmatpush1.msra.mxu0 %v124
  %450 = vmatprep.subr.mxu0 0.0
  %451 = vmatpush1.msra.mxu0 %v125
  %452 = vmatprep.subr.mxu0 0.0
  %453 = vmatpush1.msra.mxu0 %v126
  %454 = vmatprep.subr.mxu0 0.0
  %455 = vmatpush1.msra.mxu0 %v127
  %456 = vmatprep.subr.mxu0 0.0
  %457 = vmatpush1.msra.mxu0 0.0
  %458 = vmatprep.subr.mxu0 0.0
  %459 = vmatpush1.msra.mxu0 0.0
  %460 = vmatprep.subr.mxu0 0.0
  %461 = vmatpush1.msra.mxu0 0.0
  %462 = vmatprep.subr.mxu0 0.0
  %463 = vmatpush1.msra.mxu0 0.0
  %464 = vmatprep.subr.mxu0 0.0
  %465 = vmatpush1.msra.mxu0 0.0
  %466 = vmatprep.subr.mxu0 0.0
  %467 = vmatpush1.msra.mxu0 0.0
  %468 = vmatprep.subr.mxu0 0.0
  %469 = vmatpush1.msra.mxu0 0.0
  %470 = vmatprep.subr.mxu0 0.0
  %471 = vmatpush1.msra.mxu0 0.0
  %472 = vmatprep.subr.mxu0 0.0
  %473 = vmatpush1.msra.mxu0 0.0
  %474 = vmatprep.subr.mxu0 0.0
  %475 = vmatpush1.msra.mxu0 0.0
  %476 = vmatprep.subr.mxu0 0.0
  %477 = vmatpush1.msra.mxu0 0.0
  %478 = vmatprep.subr.mxu0 0.0
  %479 = vmatpush1.msra.mxu0 0.0
  %480 = vmatprep.subr.mxu0 0.0
  %481 = vmatpush1.msra.mxu0 0.0
  %482 = vmatprep.subr.mxu0 0.0
  %483 = vmatpush1.msra.mxu0 0.0
  %484 = vmatprep.subr.mxu0 0.0
  %485 = vmatpush1.msra.mxu0 0.0
  %486 = vmatprep.subr.mxu0 0.0
  %487 = vmatpush1.msra.mxu0 0.0
  %488 = vmatprep.subr.mxu0 0.0
  %489 = vmatpush1.msra.mxu0 0.0
  %490 = vmatprep.subr.mxu0 0.0
  %491 = vmatpush1.msra.mxu0 0.0
  %492 = vmatprep.subr.mxu0 0.0
  %493 = vmatpush1.msra.mxu0 0.0
  %494 = vmatprep.subr.mxu0 0.0
  %495 = vmatpush1.msra.mxu0 0.0
  %496 = vmatprep.subr.mxu0 0.0
  %497 = vmatpush1.msra.mxu0 0.0
  %498 = vmatprep.subr.mxu0 0.0
  %499 = vmatpush1.msra.mxu0 0.0
  %500 = vmatprep.subr.mxu0 0.0
  %501 = vmatpush1.msra.mxu0 0.0
  %502 = vmatprep.subr.mxu0 0.0
  %503 = vmatpush1.msra.mxu0 0.0
  %504 = vmatprep.subr.mxu0 0.0
  %505 = vmatpush1.msra.mxu0 0.0
  %506 = vmatprep.subr.mxu0 0.0
  %507 = vmatpush1.msra.mxu0 0.0
  %508 = vmatprep.subr.mxu0 0.0
  %509 = vmatpush1.msra.mxu0 0.0
  %510 = vmatprep.subr.mxu0 0.0
  %511 = vmatpush1.msra.mxu0 0.0
  %512 = vmatprep.mubr.f32.mxu0 0.0
  %513 = vmatmul.mubr.f32.gmra.mrb[0].mxu0 %v446
  %v514 = vpop.f32.mrb[0].mxu0
  %v515 = vadd.f32 0.0, %v514
  %v516 = vpop.f32.mrb[0].mxu0
  %517 = vdwg.mxu0
  %v518 = vadd.f32 %v444, %v515
  %v519 = vtanh.pop %v518
  %s520 = scalar_lea.vmem [#allocation3], 8
  %521 = vst.msk [vmem:[%s520] sm:$0x3] %vm204, %v519
  %s522 = scalar_lea.vmem [#allocation2], 10
  %v523 = vld [vmem:[%s522] sm:$0x3]
  %v525 = vsel %vm121, %v519, 0
  %527 = vmatprep.subr.mxu0 0.0
  %528 = vmatpush1.msra.mxu0 %v124
  %529 = vmatprep.subr.mxu0 0.0
  %530 = vmatpush1.msra.mxu0 %v125
  %531 = vmatprep.subr.mxu0 0.0
  %532 = vmatpush1.msra.mxu0 %v126
  %533 = vmatprep.subr.mxu0 0.0
  %534 = vmatpush1.msra.mxu0 %v127
  %535 = vmatprep.subr.mxu0 0.0
  %536 = vmatpush1.msra.mxu0 0.0
  %537 = vmatprep.subr.mxu0 0.0
  %538 = vmatpush1.msra.mxu0 0.0
  %539 = vmatprep.subr.mxu0 0.0
  %540 = vmatpush1.msra.mxu0 0.0
  %541 = vmatprep.subr.mxu0 0.0
  %542 = vmatpush1.msra.mxu0 0.0
  %543 = vmatprep.subr.mxu0 0.0
  %544 = vmatpush1.msra.mxu0 0.0
  %545 = vmatprep.subr.mxu0 0.0
  %546 = vmatpush1.msra.mxu0 0.0
  %547 = vmatprep.subr.mxu0 0.0
  %548 = vmatpush1.msra.mxu0 0.0
  %549 = vmatprep.subr.mxu0 0.0
  %550 = vmatpush1.msra.mxu0 0.0
  %551 = vmatprep.subr.mxu0 0.0
  %552 = vmatpush1.msra.mxu0 0.0
  %553 = vmatprep.subr.mxu0 0.0
  %554 = vmatpush1.msra.mxu0 0.0
  %555 = vmatprep.subr.mxu0 0.0
  %556 = vmatpush1.msra.mxu0 0.0
  %557 = vmatprep.subr.mxu0 0.0
  %558 = vmatpush1.msra.mxu0 0.0
  %559 = vmatprep.subr.mxu0 0.0
  %560 = vmatpush1.msra.mxu0 0.0
  %561 = vmatprep.subr.mxu0 0.0
  %562 = vmatpush1.msra.mxu0 0.0
  %563 = vmatprep.subr.mxu0 0.0
  %564 = vmatpush1.msra.mxu0 0.0
  %565 = vmatprep.subr.mxu0 0.0
  %566 = vmatpush1.msra.mxu0 0.0
  %567 = vmatprep.subr.mxu0 0.0
  %568 = vmatpush1.msra.mxu0 0.0
  %569 = vmatprep.subr.mxu0 0.0
  %570 = vmatpush1.msra.mxu0 0.0
  %571 = vmatprep.subr.mxu0 0.0
  %572 = vmatpush1.msra.mxu0 0.0
  %573 = vmatprep.subr.mxu0 0.0
  %574 = vmatpush1.msra.mxu0 0.0
  %575 = vmatprep.subr.mxu0 0.0
  %576 = vmatpush1.msra.mxu0 0.0
  %577 = vmatprep.subr.mxu0 0.0
  %578 = vmatpush1.msra.mxu0 0.0
  %579 = vmatprep.subr.mxu0 0.0
  %580 = vmatpush1.msra.mxu0 0.0
  %581 = vmatprep.subr.mxu0 0.0
  %582 = vmatpush1.msra.mxu0 0.0
  %583 = vmatprep.subr.mxu0 0.0
  %584 = vmatpush1.msra.mxu0 0.0
  %585 = vmatprep.subr.mxu0 0.0
  %586 = vmatpush1.msra.mxu0 0.0
  %587 = vmatprep.subr.mxu0 0.0
  %588 = vmatpush1.msra.mxu0 0.0
  %589 = vmatprep.subr.mxu0 0.0
  %590 = vmatpush1.msra.mxu0 0.0
  %591 = vmatprep.mubr.f32.mxu0 0.0
  %592 = vmatmul.mubr.f32.gmra.mrb[0].mxu0 %v525
  %v593 = vpop.f32.mrb[0].mxu0
  %v594 = vadd.f32 0.0, %v593
  %v595 = vpop.f32.mrb[0].mxu0
  %596 = vdwg.mxu0
  %v597 = vadd.f32 %v523, %v594
  %v598 = vtanh.pop %v597
  %s599 = scalar_lea.vmem [#allocation3], 10
  %600 = vst.msk [vmem:[%s599] sm:$0x3] %vm204, %v598
  %s601 = scalar_lea.vmem [#allocation2], 12
  %v602 = vld [vmem:[%s601] sm:$0x3]
  %v604 = vsel %vm121, %v598, 0
  %606 = vmatprep.subr.mxu0 0.0
  %607 = vmatpush1.msra.mxu0 %v124
  %608 = vmatprep.subr.mxu0 0.0
  %609 = vmatpush1.msra.mxu0 %v125
  %610 = vmatprep.subr.mxu0 0.0
  %611 = vmatpush1.msra.mxu0 %v126
  %612 = vmatprep.subr.mxu0 0.0
  %613 = vmatpush1.msra.mxu0 %v127
  %614 = vmatprep.subr.mxu0 0.0
  %615 = vmatpush1.msra.mxu0 0.0
  %616 = vmatprep.subr.mxu0 0.0
  %617 = vmatpush1.msra.mxu0 0.0
  %618 = vmatprep.subr.mxu0 0.0
  %619 = vmatpush1.msra.mxu0 0.0
  %620 = vmatprep.subr.mxu0 0.0
  %621 = vmatpush1.msra.mxu0 0.0
  %622 = vmatprep.subr.mxu0 0.0
  %623 = vmatpush1.msra.mxu0 0.0
  %624 = vmatprep.subr.mxu0 0.0
  %625 = vmatpush1.msra.mxu0 0.0
  %626 = vmatprep.subr.mxu0 0.0
  %627 = vmatpush1.msra.mxu0 0.0
  %628 = vmatprep.subr.mxu0 0.0
  %629 = vmatpush1.msra.mxu0 0.0
  %630 = vmatprep.subr.mxu0 0.0
  %631 = vmatpush1.msra.mxu0 0.0
  %632 = vmatprep.subr.mxu0 0.0
  %633 = vmatpush1.msra.mxu0 0.0
  %634 = vmatprep.subr.mxu0 0.0
  %635 = vmatpush1.msra.mxu0 0.0
  %636 = vmatprep.subr.mxu0 0.0
  %637 = vmatpush1.msra.mxu0 0.0
  %638 = vmatprep.subr.mxu0 0.0
  %639 = vmatpush1.msra.mxu0 0.0
  %640 = vmatprep.subr.mxu0 0.0
  %641 = vmatpush1.msra.mxu0 0.0
  %642 = vmatprep.subr.mxu0 0.0
  %643 = vmatpush1.msra.mxu0 0.0
  %644 = vmatprep.subr.mxu0 0.0
  %645 = vmatpush1.msra.mxu0 0.0
  %646 = vmatprep.subr.mxu0 0.0
  %647 = vmatpush1.msra.mxu0 0.0
  %648 = vmatprep.subr.mxu0 0.0
  %649 = vmatpush1.msra.mxu0 0.0
  %650 = vmatprep.subr.mxu0 0.0
  %651 = vmatpush1.msra.mxu0 0.0
  %652 = vmatprep.subr.mxu0 0.0
  %653 = vmatpush1.msra.mxu0 0.0
  %654 = vmatprep.subr.mxu0 0.0
  %655 = vmatpush1.msra.mxu0 0.0
  %656 = vmatprep.subr.mxu0 0.0
  %657 = vmatpush1.msra.mxu0 0.0
  %658 = vmatprep.subr.mxu0 0.0
  %659 = vmatpush1.msra.mxu0 0.0
  %660 = vmatprep.subr.mxu0 0.0
  %661 = vmatpush1.msra.mxu0 0.0
  %662 = vmatprep.subr.mxu0 0.0
  %663 = vmatpush1.msra.mxu0 0.0
  %664 = vmatprep.subr.mxu0 0.0
  %665 = vmatpush1.msra.mxu0 0.0
  %666 = vmatprep.subr.mxu0 0.0
  %667 = vmatpush1.msra.mxu0 0.0
  %668 = vmatprep.subr.mxu0 0.0
  %669 = vmatpush1.msra.mxu0 0.0
  %670 = vmatprep.mubr.f32.mxu0 0.0
  %671 = vmatmul.mubr.f32.gmra.mrb[0].mxu0 %v604
  %v672 = vpop.f32.mrb[0].mxu0
  %v673 = vadd.f32 0.0, %v672
  %v674 = vpop.f32.mrb[0].mxu0
  %675 = vdwg.mxu0
  %v676 = vadd.f32 %v602, %v673
  %v677 = vtanh.pop %v676
  %s678 = scalar_lea.vmem [#allocation3], 12
  %679 = vst.msk [vmem:[%s678] sm:$0x3] %vm204, %v677
  %s680 = scalar_lea.vmem [#allocation2], 14
  %v681 = vld [vmem:[%s680] sm:$0x3]
  %v683 = vsel %vm121, %v677, 0
  %685 = vmatprep.subr.mxu0 0.0
  %686 = vmatpush1.msra.mxu0 %v124
  %687 = vmatprep.subr.mxu0 0.0
  %688 = vmatpush1.msra.mxu0 %v125
  %689 = vmatprep.subr.mxu0 0.0
  %690 = vmatpush1.msra.mxu0 %v126
  %691 = vmatprep.subr.mxu0 0.0
  %692 = vmatpush1.msra.mxu0 %v127
  %693 = vmatprep.subr.mxu0 0.0
  %694 = vmatpush1.msra.mxu0 0.0
  %695 = vmatprep.subr.mxu0 0.0
  %696 = vmatpush1.msra.mxu0 0.0
  %697 = vmatprep.subr.mxu0 0.0
  %698 = vmatpush1.msra.mxu0 0.0
  %699 = vmatprep.subr.mxu0 0.0
  %700 = vmatpush1.msra.mxu0 0.0
  %701 = vmatprep.subr.mxu0 0.0
  %702 = vmatpush1.msra.mxu0 0.0
  %703 = vmatprep.subr.mxu0 0.0
  %704 = vmatpush1.msra.mxu0 0.0
  %705 = vmatprep.subr.mxu0 0.0
  %706 = vmatpush1.msra.mxu0 0.0
  %707 = vmatprep.subr.mxu0 0.0
  %708 = vmatpush1.msra.mxu0 0.0
  %709 = vmatprep.subr.mxu0 0.0
  %710 = vmatpush1.msra.mxu0 0.0
  %711 = vmatprep.subr.mxu0 0.0
  %712 = vmatpush1.msra.mxu0 0.0
  %713 = vmatprep.subr.mxu0 0.0
  %714 = vmatpush1.msra.mxu0 0.0
  %715 = vmatprep.subr.mxu0 0.0
  %716 = vmatpush1.msra.mxu0 0.0
  %717 = vmatprep.subr.mxu0 0.0
  %718 = vmatpush1.msra.mxu0 0.0
  %719 = vmatprep.subr.mxu0 0.0
  %720 = vmatpush1.msra.mxu0 0.0
  %721 = vmatprep.subr.mxu0 0.0
  %722 = vmatpush1.msra.mxu0 0.0
  %723 = vmatprep.subr.mxu0 0.0
  %724 = vmatpush1.msra.mxu0 0.0
  %725 = vmatprep.subr.mxu0 0.0
  %726 = vmatpush1.msra.mxu0 0.0
  %727 = vmatprep.subr.mxu0 0.0
  %728 = vmatpush1.msra.mxu0 0.0
  %729 = vmatprep.subr.mxu0 0.0
  %730 = vmatpush1.msra.mxu0 0.0
  %731 = vmatprep.subr.mxu0 0.0
  %732 = vmatpush1.msra.mxu0 0.0
  %733 = vmatprep.subr.mxu0 0.0
  %734 = vmatpush1.msra.mxu0 0.0
  %735 = vmatprep.subr.mxu0 0.0
  %736 = vmatpush1.msra.mxu0 0.0
  %737 = vmatprep.subr.mxu0 0.0
  %738 = vmatpush1.msra.mxu0 0.0
  %739 = vmatprep.subr.mxu0 0.0
  %740 = vmatpush1.msra.mxu0 0.0
  %741 = vmatprep.subr.mxu0 0.0
  %742 = vmatpush1.msra.mxu0 0.0
  %743 = vmatprep.subr.mxu0 0.0
  %744 = vmatpush1.msra.mxu0 0.0
  %745 = vmatprep.subr.mxu0 0.0
  %746 = vmatpush1.msra.mxu0 0.0
  %747 = vmatprep.subr.mxu0 0.0
  %748 = vmatpush1.msra.mxu0 0.0
  %749 = vmatprep.mubr.f32.mxu0 0.0
  %750 = vmatmul.mubr.f32.gmra.mrb[0].mxu0 %v683
  %v751 = vpop.f32.mrb[0].mxu0
  %v752 = vadd.f32 0.0, %v751
  %v753 = vpop.f32.mrb[0].mxu0
  %754 = vdwg.mxu0
  %v755 = vadd.f32 %v681, %v752
  %v756 = vtanh.pop %v755
  %s757 = scalar_lea.vmem [#allocation3], 14
  %758 = vst.msk [vmem:[%s757] sm:$0x3] %vm204, %v756
  %v759 = vld [vmem:[#allocation3] sm:$0x3]
  %v760 = vld [vmem:[#allocation3 + $0x2] sm:$0x3]
  %v761 = vld [vmem:[#allocation3 + $0x4] sm:$0x3]
  %v762 = vld [vmem:[#allocation3 + $0x6] sm:$0x3]
  %v763 = vld [vmem:[#allocation3 + $0x8] sm:$0x3]
  %v764 = vld [vmem:[#allocation3 + $0xa] sm:$0x3]
  %v765 = vld [vmem:[#allocation3 + $0xc] sm:$0x3]
  %v766 = vld [vmem:[#allocation3 + $0xe] sm:$0x3]
  %v767 = vld [vmem:[%s4] sm:$0x1]
  %v769 = vlaneseq
  %v770 = vshrl.u32 %v769, 7
  %v771 = vsub.s32 0, %v770
  %v772 = vrot.slane %v767, %v771
  %v774 = vmul.f32 %v759, %v772
  %v775 = vmul.f32 %v760, %v772
  %v776 = vmul.f32 %v761, %v772
  %v777 = vmul.f32 %v762, %v772
  %v778 = vmul.f32 %v763, %v772
  %v779 = vmul.f32 %v764, %v772
  %v780 = vmul.f32 %v765, %v772
  %v781 = vmul.f32 %v766, %v772
  %v782 = vsel %vm204, %v774, 0.0
  %783 = vadd.xlane.f32.xlu0 %v782
  %v784 = vpop.xlane.xlu0 %783
  %v785 = vsel %vm204, %v775, 0.0
  %786 = vadd.xlane.f32.xlu0 %v785
  %v787 = vpop.xlane.xlu0 %786
  %v788 = vsel %vm204, %v776, 0.0
  %789 = vadd.xlane.f32.xlu0 %v788
  %v790 = vpop.xlane.xlu0 %789
  %v791 = vsel %vm204, %v777, 0.0
  %792 = vadd.xlane.f32.xlu0 %v791
  %v793 = vpop.xlane.xlu0 %792
  %v794 = vsel %vm204, %v778, 0.0
  %795 = vadd.xlane.f32.xlu0 %v794
  %v796 = vpop.xlane.xlu0 %795
  %v797 = vsel %vm204, %v779, 0.0
  %798 = vadd.xlane.f32.xlu0 %v797
  %v799 = vpop.xlane.xlu0 %798
  %v800 = vsel %vm204, %v780, 0.0
  %801 = vadd.xlane.f32.xlu0 %v800
  %v802 = vpop.xlane.xlu0 %801
  %v803 = vsel %vm204, %v781, 0.0
  %804 = vadd.xlane.f32.xlu0 %v803
  %v805 = vpop.xlane.xlu0 %804
  %v814 = vlaneseq
  %v815 = vand.u32 %v814, 127
  %v816 = vlaneseq
  %v817 = vshrl.u32 %v816, 7
  %v818 = vsub.s32 %v815, %v817
  %v819 = vrot.slane %v784, %v818
  %v820 = vlaneseq
  %v821 = vshrl.u32 %v820, 7
  %v822 = vsub.s32 %v815, %v821
  %v823 = vrot.slane %v787, %v822
  %v824 = vlaneseq
  %v825 = vshrl.u32 %v824, 7
  %v826 = vsub.s32 %v815, %v825
  %v827 = vrot.slane %v790, %v826
  %v828 = vlaneseq
  %v829 = vshrl.u32 %v828, 7
  %v830 = vsub.s32 %v815, %v829
  %v831 = vrot.slane %v793, %v830
  %v832 = vlaneseq
  %v833 = vshrl.u32 %v832, 7
  %v834 = vsub.s32 %v815, %v833
  %v835 = vrot.slane %v796, %v834
  %v836 = vlaneseq
  %v837 = vshrl.u32 %v836, 7
  %v838 = vsub.s32 %v815, %v837
  %v839 = vrot.slane %v799, %v838
  %v840 = vlaneseq
  %v841 = vshrl.u32 %v840, 7
  %v842 = vsub.s32 %v815, %v841
  %v843 = vrot.slane %v802, %v842
  %v844 = vlaneseq
  %v845 = vshrl.u32 %v844, 7
  %v846 = vsub.s32 %v815, %v845
  %v847 = vrot.slane %v805, %v846
  %vm848 = vcmask 1041409
  %v849 = vsel %vm848, %v823, %v819
  %vm850 = vcmask 1042434
  %v851 = vsel %vm850, %v827, %v849
  %vm852 = vcmask 1043459
  %v853 = vsel %vm852, %v831, %v851
  %vm854 = vcmask 1044484
  %v855 = vsel %vm854, %v835, %v853
  %vm856 = vcmask 1045509
  %v857 = vsel %vm856, %v839, %v855
  %vm858 = vcmask 1046534
  %v859 = vsel %vm858, %v843, %v857
  %vm860 = vcmask 1047559
  %v861 = vsel %vm860, %v847, %v859
  %863 = vxpose.xlu0.b32.start [1/16] %v861, 128
  %864 = vxpose.xlu0.b32.cont [2/16] 0.0, 128
  %865 = vxpose.xlu0.b32.cont [3/16] 0.0, 128
  %866 = vxpose.xlu0.b32.cont [4/16] 0.0, 128
  %867 = vxpose.xlu0.b32.cont [5/16] 0.0, 128
  %868 = vxpose.xlu0.b32.cont [6/16] 0.0, 128
  %869 = vxpose.xlu0.b32.cont [7/16] 0.0, 128
  %870 = vxpose.xlu0.b32.cont [8/16] 0.0, 128
  %871 = vxpose.xlu0.b32.cont [9/16] 0.0, 128
  %872 = vxpose.xlu0.b32.cont [10/16] 0.0, 128
  %873 = vxpose.xlu0.b32.cont [11/16] 0.0, 128
  %874 = vxpose.xlu0.b32.cont [12/16] 0.0, 128
  %875 = vxpose.xlu0.b32.cont [13/16] 0.0, 128
  %876 = vxpose.xlu0.b32.cont [14/16] 0.0, 128
  %877 = vxpose.xlu0.b32.cont [15/16] 0.0, 128
  %878 = vxpose.xlu0.b32.end [16/16] 0.0, 128
  %v879 = vpop.trf.xlu0
  %v880 = vpop.trf.xlu0
  %v881 = vpop.trf.xlu0
  %v882 = vpop.trf.xlu0
  %v883 = vpop.trf.xlu0
  %v884 = vpop.trf.xlu0
  %v885 = vpop.trf.xlu0
  %v886 = vpop.trf.xlu0
  %v887 = vpop.trf.xlu0
  %v888 = vpop.trf.xlu0
  %v889 = vpop.trf.xlu0
  %v890 = vpop.trf.xlu0
  %v891 = vpop.trf.xlu0
  %v892 = vpop.trf.xlu0
  %v893 = vpop.trf.xlu0
  %v894 = vpop.trf.xlu0
  %v895 = vld [vmem:[#allocation4] sm:$0x1]
  %v897 = vlaneseq
  %v898 = vshrl.u32 %v897, 7
  %v899 = vsub.s32 0, %v898
  %v900 = vrot.slane %v895, %v899
  %901 = vset.pattern.permute.xlu0 0
  %902 = vperm.xlu0 %901, %v900
  %v903 = vpop.permute.xlu0 %902
  %v905 = vadd.f32 %v879, %v903
  %v906 = vxor.u32 %v905, 2147483648
  %v907 = vmul.f32 %v906, 1.442695
  %v908 = vpow.pop %v907
  %v909 = vadd.f32 %v908, 1.0
  %v910 = vrcp.pop %v909
  %v911 = vmul.f32 1.0, %v910
  %vm912 = vcmask 58368
  %913 = vst.msk [vmem:[%s6] sm:$0x3] %vm912, %v911
  // Predicated region
  $region26: #{vanilla_rnn_forward.1} parent=0 // pred_check
    _
  $region27: #{vanilla_rnn_forward.1} parent=0 // pred_check_branch
    %915 = sbr.rel (0) target = $region29
  $region28: #{vanilla_rnn_forward.1} parent=0 // pred_region
    _
  $region29: #{vanilla_rnn_forward.1} parent=0 // pred_fallthru
    _
  // Predicated region
  $region30: #{vanilla_rnn_forward.1} parent=0 // pred_check
    _
  $region31: #{vanilla_rnn_forward.1} parent=0 // pred_check_branch
    %917 = sbr.rel (0) target = $region33
  $region32: #{vanilla_rnn_forward.1} parent=0 // pred_region
    _
  $region33: #{vanilla_rnn_forward.1} parent=0 // pred_fallthru
    _

</llo_original>
